<compile_context>
chip_gen: v5e
topology: v5e:2x2
jax: 0.10.0
libtpu: 0.0.40
codegen_flags: <defaults>
</compile_context>

<pallas_src>
import functools

import jax
import jax.numpy as jnp
from jax.experimental import pallas as pl
from jax.experimental.pallas import tpu as pltpu


def _round_up(a, m):
    return (a + m - 1) // m * m


def _weight_norm(v, g):
    """w = g * v / ||v||_2, norm over all dims except dim 0 (PyTorch default)."""
    v32 = v.astype(jnp.float32)
    norm = jnp.sqrt(jnp.sum(jnp.square(v32), axis=(1, 2), keepdims=True))
    return g.reshape(-1, 1, 1).astype(jnp.float32) * v32 / norm


def _temporal_block_kernel(*refs, dilation, kernel_size, pad, has_downsample):
    if has_downsample:
        (x_ref, w1_ref, b1_ref, w2_ref, b2_ref, wd_ref, bd_ref,
         o_ref, xbuf, h1buf, xstk, hstk) = refs
    else:
        (x_ref, w1_ref, b1_ref, w2_ref, b2_ref,
         o_ref, xbuf, h1buf, xstk, hstk) = refs
        wd_ref = bd_ref = None

    t = pl.program_id(1)                 # L-tile index (sequential, "arbitrary")
    k, d, p = kernel_size, dilation, pad
    c_in = x_ref.shape[1]
    c_out = o_ref.shape[1]
    lt = o_ref.shape[2]                  # L_TILE

    # ---- carry / reset the p-column causal halo (chomp + left pad folded in)
    if p > 0:
        @pl.when(t == 0)
        def _():
            xbuf[:, :p] = jnp.zeros((c_in, p), xbuf.dtype)
            h1buf[:, :p] = jnp.zeros((c_out, p), h1buf.dtype)

        @pl.when(t > 0)
        def _():
            # tail of the previous tile becomes this tile's left halo
            xbuf[:, :p] = xbuf[:, lt:lt + p]
            h1buf[:, :p] = h1buf[:, lt:lt + p]

    x_tile = x_ref[0]                            # (C_in, L_TILE), input dtype
    xbuf[:, p:] = x_tile.astype(xbuf.dtype)      # bf16 copy feeding the MXU

    # ---- conv1: K taps folded into one deep bf16 contraction ----------------
    for j in range(k):                           # static -> unrolled slice copies
        xstk[j * c_in:(j + 1) * c_in, :] = xbuf[:, j * d:j * d + lt]
    acc1 = jnp.dot(w1_ref[...], xstk[...], preferred_element_type=jnp.float32)
    h1 = jnp.maximum(acc1 + b1_ref[...], 0.0)    # bias (f32) + ReLU
    # TODO(synk): training-mode dropout (pltpu.prng_seed/prng_random_bits);
    # inference dropout is identity.

    h1buf[:, p:] = h1.astype(h1buf.dtype)

    # ---- conv2 ---------------------------------------------------------------
    for j in range(k):
        hstk[j * c_out:(j + 1) * c_out, :] = h1buf[:, j * d:j * d + lt]
    acc2 = jnp.dot(w2_ref[...], hstk[...], preferred_element_type=jnp.float32)
    h2 = jnp.maximum(acc2 + b2_ref[...], 0.0)

    # ---- residual path + final ReLU -------------------------------------------
    if has_downsample:
        res = jnp.dot(wd_ref[...], xbuf[:, p:], preferred_element_type=jnp.float32)
        res = res + bd_ref[...]
    else:
        res = x_tile.astype(jnp.float32)         # identity residual in f32

    o_ref[0] = jnp.maximum(h2 + res, 0.0).astype(o_ref.dtype)


def temporal_block(x, v1, g1, b1, v2, g2, b2, wd=None, bd=None, *,
                   kernel_size, stride=1, dilation=1, padding, dropout=0.2,
                   l_tile=None):
    """Forward pass of TemporalBlock (inference). x: (N, C_in, L)."""
    del dropout                                  # eval mode: dropout is identity
    n, c_in, l = x.shape
    c_out = v1.shape[0]
    k = kernel_size
    p = padding
    d = dilation
    assert stride == 1, "TCN TemporalBlock uses stride=1"
    assert p == d * (k - 1), (
        "residual add requires causal padding = dilation * (kernel_size - 1)")
    has_downsample = wd is not None
    if not has_downsample:
        assert c_in == c_out, "identity residual requires C_in == C_out"

    compute_dtype = jnp.bfloat16

    # Weight-norm re-parameterisation (tiny, done once outside the kernel),
    # folded tap-major so each conv is ONE (C_out, K*C) MXU contraction.
    w1 = _weight_norm(v1, g1)                    # (C_out, C_in, K) f32
    w2 = _weight_norm(v2, g2)                    # (C_out, C_out, K) f32
    w1f = jnp.transpose(w1, (0, 2, 1)).reshape(c_out, k * c_in).astype(compute_dtype)
    w2f = jnp.transpose(w2, (0, 2, 1)).reshape(c_out, k * c_out).astype(compute_dtype)
    b1c = b1.reshape(c_out, 1).astype(jnp.float32)
    b2c = b2.reshape(c_out, 1).astype(jnp.float32)

    # L-tile selection: lane-dense (multiple of 128), capped at 512, >= p so the
    # causal halo can be carried from the previous tile.
    if l_tile is None:
        l_tile = min(512, _round_up(l, 128))
        l_tile = max(l_tile, _round_up(p, 128))
    assert l_tile % 128 == 0 and l_tile >= p
    l_padded = _round_up(l, l_tile)
    if l_padded != l:
        # Right pad only (causal conv: padded columns never feed real outputs).
        x_in = jnp.pad(x, ((0, 0), (0, 0), (0, l_padded - l)))
    else:
        x_in = x

    inputs = [x_in, w1f, b1c, w2f, b2c]
    in_specs = [
        pl.BlockSpec((1, c_in, l_tile), lambda b, t: (b, 0, t)),
        pl.BlockSpec((c_out, k * c_in), lambda b, t: (0, 0)),
        pl.BlockSpec((c_out, 1), lambda b, t: (0, 0)),
        pl.BlockSpec((c_out, k * c_out), lambda b, t: (0, 0)),
        pl.BlockSpec((c_out, 1), lambda b, t: (0, 0)),
    ]
    if has_downsample:
        inputs += [wd.reshape(c_out, c_in).astype(compute_dtype),
                   bd.reshape(c_out, 1).astype(jnp.float32)]
        in_specs += [
            pl.BlockSpec((c_out, c_in), lambda b, t: (0, 0)),
            pl.BlockSpec((c_out, 1), lambda b, t: (0, 0)),
        ]

    kernel = functools.partial(_temporal_block_kernel,
                               dilation=d, kernel_size=k, pad=p,
                               has_downsample=has_downsample)

    out = pl.pallas_call(
        kernel,
        out_shape=jax.ShapeDtypeStruct((n, c_out, l_padded), x.dtype),
        grid_spec=pltpu.PrefetchScalarGridSpec(
            num_scalar_prefetch=0,
            grid=(n, l_padded // l_tile),
            in_specs=in_specs,
            out_specs=pl.BlockSpec((1, c_out, l_tile), lambda b, t: (b, 0, t)),
            scratch_shapes=[
                pltpu.VMEM((c_in, p + l_tile), compute_dtype),    # x  + halo
                pltpu.VMEM((c_out, p + l_tile), compute_dtype),   # h1 + halo
                pltpu.VMEM((k * c_in, l_tile), compute_dtype),    # conv1 stack
                pltpu.VMEM((k * c_out, l_tile), compute_dtype),   # conv2 stack
            ]),
        compiler_params=pltpu.CompilerParams(
            dimension_semantics=("parallel", "arbitrary")),
    )(*inputs)

    if l_padded != l:
        out = out[:, :, :l]
    return out


# ------------------------- pure-JAX reference -------------------------------
def _ref_temporal_block(x, v1, g1, b1, v2, g2, b2, wd, bd, *, dilation, padding):
    dn = ("NCH", "OIH", "NCH")
    p, d = padding, dilation
    w1 = _weight_norm(v1, g1)
    w2 = _weight_norm(v2, g2)

    y = jax.lax.conv_general_dilated(x, w1, (1,), [(p, p)], rhs_dilation=(d,),
                                     dimension_numbers=dn) + b1[None, :, None]
    y = y[:, :, :y.shape[2] - p] if p > 0 else y
    y = jnp.maximum(y, 0.0)

    y = jax.lax.conv_general_dilated(y, w2, (1,), [(p, p)], rhs_dilation=(d,),
                                     dimension_numbers=dn) + b2[None, :, None]
    y = y[:, :, :y.shape[2] - p] if p > 0 else y
    y = jnp.maximum(y, 0.0)

    if wd is not None:
        res = jax.lax.conv_general_dilated(
            x, wd, (1,), [(0, 0)], dimension_numbers=dn) + bd[None, :, None]
    else:
        res = x
    return jnp.maximum(y + res, 0.0)


if __name__ == "__main__":
    def run_case(case_key, n, c_in, c_out, l, k, d, with_downsample, l_tile=None):
        keys = jax.random.split(case_key, 7)
        p = (k - 1) * d
        v1 = 0.01 * jax.random.normal(keys[0], (c_out, c_in, k), jnp.float32)
        b1 = 0.1 * jax.random.normal(keys[1], (c_out,), jnp.float32)
        v2 = 0.01 * jax.random.normal(keys[2], (c_out, c_out, k), jnp.float32)
        b2 = 0.1 * jax.random.normal(keys[3], (c_out,), jnp.float32)
        g1 = jnp.sqrt(jnp.sum(v1 ** 2, axis=(1, 2)))  # weight_norm init: g=||v||
        g2 = jnp.sqrt(jnp.sum(v2 ** 2, axis=(1, 2)))
        if with_downsample:
            wd = 0.01 * jax.random.normal(keys[4], (c_out, c_in, 1), jnp.float32)
            bd = 0.1 * jax.random.normal(keys[5], (c_out,), jnp.float32)
        else:
            wd = bd = None
        x = jax.random.normal(keys[6], (n, c_in, l), jnp.float32)

        out = temporal_block(x, v1, g1, b1, v2, g2, b2, wd, bd,
                             kernel_size=k, stride=1, dilation=d, padding=p,
                             l_tile=l_tile)
        jax.block_until_ready(out)

        ref = _ref_temporal_block(x, v1, g1, b1, v2, g2, b2, wd, bd,
                                  dilation=d, padding=p)
        assert out.shape == ref.shape == (n, c_out, l)
        assert out.dtype == x.dtype
        err = float(jnp.max(jnp.abs(out - ref)))
        # bf16 MXU operands with f32 accumulation -> looser tolerance vs f32 ref
        assert jnp.allclose(out, ref, atol=2e-2, rtol=2e-2), err

    root = jax.random.PRNGKey(0)
    k1, k2, k3 = jax.random.split(root, 3)
    run_case(k1, 2, 4, 8, 16, 3, 2, True)                # 1x1 downsample residual
    run_case(k2, 2, 8, 8, 16, 3, 2, False)               # identity residual
    run_case(k3, 2, 4, 8, 272, 3, 2, True, l_tile=128)   # multi-tile L: halo carry + ragged L
    print("KERNEL_OK")
</pallas_src>

<mosaic_0001>
module attributes {stable_mosaic.version = 11 : i64} {
  func.func @_temporal_block_kernel(%arg0: i32, %arg1: i32, %arg2: memref<1x4x128xf32, #tpu.memory_space<vmem>>, %arg3: memref<8x12xbf16, #tpu.memory_space<vmem>>, %arg4: memref<8x1xf32, #tpu.memory_space<vmem>>, %arg5: memref<8x24xbf16, #tpu.memory_space<vmem>>, %arg6: memref<8x1xf32, #tpu.memory_space<vmem>>, %arg7: memref<8x4xbf16, #tpu.memory_space<vmem>>, %arg8: memref<8x1xf32, #tpu.memory_space<vmem>>, %arg9: memref<1x8x128xf32, #tpu.memory_space<vmem>>, %arg10: memref<4x132xbf16, #tpu.memory_space<vmem>>, %arg11: memref<8x132xbf16, #tpu.memory_space<vmem>>, %arg12: memref<12x128xbf16, #tpu.memory_space<vmem>>, %arg13: memref<24x128xbf16, #tpu.memory_space<vmem>>) attributes {dimension_semantics = [#tpu.dimension_semantics<parallel>, #tpu.dimension_semantics<arbitrary>], iteration_bounds = array<i64: 2, 1>, scalar_prefetch = 0 : i64, scratch_operands = 4 : i64, tpu.core_type = #tpu.core_type<tc>, window_params = [{transform_indices = @transform_0, window_bounds = array<i64: 1, 4, 128>}, {pipeline_mode = #tpu.pipeline_mode<synchronous>, transform_indices = @transform_1, window_bounds = array<i64: 8, 12>}, {pipeline_mode = #tpu.pipeline_mode<synchronous>, transform_indices = @transform_2, window_bounds = array<i64: 8, 1>}, {pipeline_mode = #tpu.pipeline_mode<synchronous>, transform_indices = @transform_3, window_bounds = array<i64: 8, 24>}, {pipeline_mode = #tpu.pipeline_mode<synchronous>, transform_indices = @transform_4, window_bounds = array<i64: 8, 1>}, {pipeline_mode = #tpu.pipeline_mode<synchronous>, transform_indices = @transform_5, window_bounds = array<i64: 8, 4>}, {pipeline_mode = #tpu.pipeline_mode<synchronous>, transform_indices = @transform_6, window_bounds = array<i64: 8, 1>}, {transform_indices = @transform_7, window_bounds = array<i64: 1, 8, 128>}]} {
    %c0_i32 = arith.constant 0 : i32
    %0 = arith.cmpi eq, %arg1, %c0_i32 : i32
    %1 = arith.extui %0 : i1 to i32
    %c0_i32_0 = arith.constant 0 : i32
    %2 = arith.cmpi ne, %1, %c0_i32_0 : i32
    scf.if %2 {
      %cst_55 = arith.constant 0.000000e+00 : bf16
      %52 = vector.broadcast %cst_55 : bf16 to vector<4x4xbf16>
      %c0_56 = arith.constant 0 : index
      %c0_57 = arith.constant 0 : index
      %53 = vector.load %arg10[%c0_56, %c0_57] : memref<4x132xbf16, #tpu.memory_space<vmem>>, vector<4x4xbf16>
      tpu.vector_store %arg10[%c0_56, %c0_57], %52 {strides = array<i32>} : memref<4x132xbf16, #tpu.memory_space<vmem>>, vector<4x4xbf16>,
      %cst_58 = arith.constant 0.000000e+00 : bf16
      %54 = vector.broadcast %cst_58 : bf16 to vector<8x4xbf16>
      %c0_59 = arith.constant 0 : index
      %c0_60 = arith.constant 0 : index
      %55 = vector.load %arg11[%c0_59, %c0_60] : memref<8x132xbf16, #tpu.memory_space<vmem>>, vector<8x4xbf16>
      tpu.vector_store %arg11[%c0_59, %c0_60], %54 {strides = array<i32>} : memref<8x132xbf16, #tpu.memory_space<vmem>>, vector<8x4xbf16>,
    } else {
    }
    %c0_i32_1 = arith.constant 0 : i32
    %3 = arith.cmpi sgt, %arg1, %c0_i32_1 : i32
    %4 = arith.extui %3 : i1 to i32
    %c0_i32_2 = arith.constant 0 : i32
    %5 = arith.cmpi ne, %4, %c0_i32_2 : i32
    scf.if %5 {
      %c0_55 = arith.constant 0 : index
      %c128 = arith.constant 128 : index
      %52 = vector.load %arg10[%c0_55, %c128] : memref<4x132xbf16, #tpu.memory_space<vmem>>, vector<4x4xbf16>
      %c0_56 = arith.constant 0 : index
      %c0_57 = arith.constant 0 : index
      %53 = vector.load %arg10[%c0_56, %c0_57] : memref<4x132xbf16, #tpu.memory_space<vmem>>, vector<4x4xbf16>
      tpu.vector_store %arg10[%c0_56, %c0_57], %52 {strides = array<i32>} : memref<4x132xbf16, #tpu.memory_space<vmem>>, vector<4x4xbf16>,
      %c0_58 = arith.constant 0 : index
      %c128_59 = arith.constant 128 : index
      %54 = vector.load %arg11[%c0_58, %c128_59] : memref<8x132xbf16, #tpu.memory_space<vmem>>, vector<8x4xbf16>
      %c0_60 = arith.constant 0 : index
      %c0_61 = arith.constant 0 : index
      %55 = vector.load %arg11[%c0_60, %c0_61] : memref<8x132xbf16, #tpu.memory_space<vmem>>, vector<8x4xbf16>
      tpu.vector_store %arg11[%c0_60, %c0_61], %54 {strides = array<i32>} : memref<8x132xbf16, #tpu.memory_space<vmem>>, vector<8x4xbf16>,
    } else {
    }
    %c0 = arith.constant 0 : index
    %c0_3 = arith.constant 0 : index
    %c0_4 = arith.constant 0 : index
    %6 = vector.load %arg2[%c0, %c0_3, %c0_4] : memref<1x4x128xf32, #tpu.memory_space<vmem>>, vector<1x4x128xf32>
    %7 = vector.shape_cast %6 : vector<1x4x128xf32> to vector<4x128xf32>
    %8 = arith.truncf %7 : vector<4x128xf32> to vector<4x128xbf16>
    %c0_5 = arith.constant 0 : index
    %c4 = arith.constant 4 : index
    %9 = vector.load %arg10[%c0_5, %c4] : memref<4x132xbf16, #tpu.memory_space<vmem>>, vector<4x128xbf16>
    tpu.vector_store %arg10[%c0_5, %c4], %8 {strides = array<i32>} : memref<4x132xbf16, #tpu.memory_space<vmem>>, vector<4x128xbf16>,
    %c0_6 = arith.constant 0 : index
    %c0_7 = arith.constant 0 : index
    %10 = vector.load %arg10[%c0_6, %c0_7] : memref<4x132xbf16, #tpu.memory_space<vmem>>, vector<4x128xbf16>
    %c0_8 = arith.constant 0 : index
    %c0_9 = arith.constant 0 : index
    %11 = vector.load %arg12[%c0_8, %c0_9] : memref<12x128xbf16, #tpu.memory_space<vmem>>, vector<4x128xbf16>
    tpu.vector_store %arg12[%c0_8, %c0_9], %10 {strides = array<i32>} : memref<12x128xbf16, #tpu.memory_space<vmem>>, vector<4x128xbf16>,
    %c0_10 = arith.constant 0 : index
    %c2 = arith.constant 2 : index
    %12 = vector.load %arg10[%c0_10, %c2] : memref<4x132xbf16, #tpu.memory_space<vmem>>, vector<4x128xbf16>
    %c4_11 = arith.constant 4 : index
    %c0_12 = arith.constant 0 : index
    %13 = vector.load %arg12[%c4_11, %c0_12] : memref<12x128xbf16, #tpu.memory_space<vmem>>, vector<4x128xbf16>
    tpu.vector_store %arg12[%c4_11, %c0_12], %12 {strides = array<i32>} : memref<12x128xbf16, #tpu.memory_space<vmem>>, vector<4x128xbf16>,
    %c0_13 = arith.constant 0 : index
    %c4_14 = arith.constant 4 : index
    %14 = vector.load %arg10[%c0_13, %c4_14] : memref<4x132xbf16, #tpu.memory_space<vmem>>, vector<4x128xbf16>
    %c8 = arith.constant 8 : index
    %c0_15 = arith.constant 0 : index
    %15 = vector.load %arg12[%c8, %c0_15] : memref<12x128xbf16, #tpu.memory_space<vmem>>, vector<4x128xbf16>
    tpu.vector_store %arg12[%c8, %c0_15], %14 {strides = array<i32>} : memref<12x128xbf16, #tpu.memory_space<vmem>>, vector<4x128xbf16>,
    %c0_16 = arith.constant 0 : index
    %c0_17 = arith.constant 0 : index
    %16 = vector.load %arg3[%c0_16, %c0_17] : memref<8x12xbf16, #tpu.memory_space<vmem>>, vector<8x12xbf16>
    %c0_18 = arith.constant 0 : index
    %c0_19 = arith.constant 0 : index
    %17 = vector.load %arg12[%c0_18, %c0_19] : memref<12x128xbf16, #tpu.memory_space<vmem>>, vector<12x128xbf16>
    %cst = arith.constant dense<0.000000e+00> : vector<8x128xf32>
    %18 = tpu.matmul %16, %17, %cst {dimension_numbers = #tpu.dot_dimension_numbers<[1], [0], [0], [1], [0, 0, 1, 1], [], []>} : vector<8x12xbf16>, vector<12x128xbf16>, vector<8x128xf32> -> vector<8x128xf32>
    %c0_20 = arith.constant 0 : index
    %c0_21 = arith.constant 0 : index
    %19 = vector.load %arg4[%c0_20, %c0_21] : memref<8x1xf32, #tpu.memory_space<vmem>>, vector<8x1xf32>
    %20 = vector.broadcast %19 : vector<8x1xf32> to vector<8x128xf32>
    %21 = arith.addf %18, %20 : vector<8x128xf32>
    %cst_22 = arith.constant 0.000000e+00 : f32
    %22 = vector.broadcast %cst_22 : f32 to vector<8x128xf32>
    %23 = arith.maximumf %21, %22 : vector<8x128xf32>
    %24 = arith.truncf %23 : vector<8x128xf32> to vector<8x128xbf16>
    %c0_23 = arith.constant 0 : index
    %c4_24 = arith.constant 4 : index
    %25 = vector.load %arg11[%c0_23, %c4_24] : memref<8x132xbf16, #tpu.memory_space<vmem>>, vector<8x128xbf16>
    tpu.vector_store %arg11[%c0_23, %c4_24], %24 {strides = array<i32>} : memref<8x132xbf16, #tpu.memory_space<vmem>>, vector<8x128xbf16>,
    %c0_25 = arith.constant 0 : index
    %c0_26 = arith.constant 0 : index
    %26 = vector.load %arg11[%c0_25, %c0_26] : memref<8x132xbf16, #tpu.memory_space<vmem>>, vector<8x128xbf16>
    %c0_27 = arith.constant 0 : index
    %c0_28 = arith.constant 0 : index
    %27 = vector.load %arg13[%c0_27, %c0_28] : memref<24x128xbf16, #tpu.memory_space<vmem>>, vector<8x128xbf16>
    tpu.vector_store %arg13[%c0_27, %c0_28], %26 {strides = array<i32>} : memref<24x128xbf16, #tpu.memory_space<vmem>>, vector<8x128xbf16>,
    %c0_29 = arith.constant 0 : index
    %c2_30 = arith.constant 2 : index
    %28 = vector.load %arg11[%c0_29, %c2_30] : memref<8x132xbf16, #tpu.memory_space<vmem>>, vector<8x128xbf16>
    %c8_31 = arith.constant 8 : index
    %c0_32 = arith.constant 0 : index
    %29 = vector.load %arg13[%c8_31, %c0_32] : memref<24x128xbf16, #tpu.memory_space<vmem>>, vector<8x128xbf16>
    tpu.vector_store %arg13[%c8_31, %c0_32], %28 {strides = array<i32>} : memref<24x128xbf16, #tpu.memory_space<vmem>>, vector<8x128xbf16>,
    %c0_33 = arith.constant 0 : index
    %c4_34 = arith.constant 4 : index
    %30 = vector.load %arg11[%c0_33, %c4_34] : memref<8x132xbf16, #tpu.memory_space<vmem>>, vector<8x128xbf16>
    %c16 = arith.constant 16 : index
    %c0_35 = arith.constant 0 : index
    %31 = vector.load %arg13[%c16, %c0_35] : memref<24x128xbf16, #tpu.memory_space<vmem>>, vector<8x128xbf16>
    tpu.vector_store %arg13[%c16, %c0_35], %30 {strides = array<i32>} : memref<24x128xbf16, #tpu.memory_space<vmem>>, vector<8x128xbf16>,
    %c0_36 = arith.constant 0 : index
    %c0_37 = arith.constant 0 : index
    %32 = vector.load %arg5[%c0_36, %c0_37] : memref<8x24xbf16, #tpu.memory_space<vmem>>, vector<8x24xbf16>
    %c0_38 = arith.constant 0 : index
    %c0_39 = arith.constant 0 : index
    %33 = vector.load %arg13[%c0_38, %c0_39] : memref<24x128xbf16, #tpu.memory_space<vmem>>, vector<24x128xbf16>
    %cst_40 = arith.constant dense<0.000000e+00> : vector<8x128xf32>
    %34 = tpu.matmul %32, %33, %cst_40 {dimension_numbers = #tpu.dot_dimension_numbers<[1], [0], [0], [1], [0, 0, 1, 1], [], []>} : vector<8x24xbf16>, vector<24x128xbf16>, vector<8x128xf32> -> vector<8x128xf32>
    %c0_41 = arith.constant 0 : index
    %c0_42 = arith.constant 0 : index
    %35 = vector.load %arg6[%c0_41, %c0_42] : memref<8x1xf32, #tpu.memory_space<vmem>>, vector<8x1xf32>
    %36 = vector.broadcast %35 : vector<8x1xf32> to vector<8x128xf32>
    %37 = arith.addf %34, %36 : vector<8x128xf32>
    %cst_43 = arith.constant 0.000000e+00 : f32
    %38 = vector.broadcast %cst_43 : f32 to vector<8x128xf32>
    %39 = arith.maximumf %37, %38 : vector<8x128xf32>
    %c0_44 = arith.constant 0 : index
    %c0_45 = arith.constant 0 : index
    %40 = vector.load %arg7[%c0_44, %c0_45] : memref<8x4xbf16, #tpu.memory_space<vmem>>, vector<8x4xbf16>
    %c0_46 = arith.constant 0 : index
    %c4_47 = arith.constant 4 : index
    %41 = vector.load %arg10[%c0_46, %c4_47] : memref<4x132xbf16, #tpu.memory_space<vmem>>, vector<4x128xbf16>
    %cst_48 = arith.constant dense<0.000000e+00> : vector<8x128xf32>
    %42 = tpu.matmul %40, %41, %cst_48 {dimension_numbers = #tpu.dot_dimension_numbers<[1], [0], [0], [1], [0, 0, 1, 1], [], []>} : vector<8x4xbf16>, vector<4x128xbf16>, vector<8x128xf32> -> vector<8x128xf32>
    %c0_49 = arith.constant 0 : index
    %c0_50 = arith.constant 0 : index
    %43 = vector.load %arg8[%c0_49, %c0_50] : memref<8x1xf32, #tpu.memory_space<vmem>>, vector<8x1xf32>
    %44 = vector.broadcast %43 : vector<8x1xf32> to vector<8x128xf32>
    %45 = arith.addf %42, %44 : vector<8x128xf32>
    %46 = arith.addf %39, %45 : vector<8x128xf32>
    %cst_51 = arith.constant 0.000000e+00 : f32
    %47 = vector.broadcast %cst_51 : f32 to vector<8x128xf32>
    %48 = arith.maximumf %46, %47 : vector<8x128xf32>
    %c0_52 = arith.constant 0 : index
    %c0_53 = arith.constant 0 : index
    %c0_54 = arith.constant 0 : index
    %49 = vector.load %arg9[%c0_52, %c0_53, %c0_54] : memref<1x8x128xf32, #tpu.memory_space<vmem>>, vector<1x8x128xf32>
    %50 = vector.shape_cast %49 : vector<1x8x128xf32> to vector<8x128xf32>
    %51 = vector.shape_cast %48 : vector<8x128xf32> to vector<1x8x128xf32>
    tpu.vector_store %arg9[%c0_52, %c0_53, %c0_54], %51 {strides = array<i32>} : memref<1x8x128xf32, #tpu.memory_space<vmem>>, vector<1x8x128xf32>,
    return
  }
  func.func @transform_0(%arg0: i32, %arg1: i32) -> (i32, i32, i32) {
    %c0_i32 = arith.constant 0 : i32
    %c0_i32_0 = arith.constant 0 : i32
    return %arg0, %c0_i32, %arg1 : i32, i32, i32
  }
  func.func @transform_1(%arg0: i32, %arg1: i32) -> (i32, i32) {
    %c0_i32 = arith.constant 0 : i32
    %c0_i32_0 = arith.constant 0 : i32
    %c0_i32_1 = arith.constant 0 : i32
    return %c0_i32, %c0_i32_0 : i32, i32
  }
  func.func @transform_2(%arg0: i32, %arg1: i32) -> (i32, i32) {
    %c0_i32 = arith.constant 0 : i32
    %c0_i32_0 = arith.constant 0 : i32
    %c0_i32_1 = arith.constant 0 : i32
    return %c0_i32, %c0_i32_0 : i32, i32
  }
  func.func @transform_3(%arg0: i32, %arg1: i32) -> (i32, i32) {
    %c0_i32 = arith.constant 0 : i32
    %c0_i32_0 = arith.constant 0 : i32
    %c0_i32_1 = arith.constant 0 : i32
    return %c0_i32, %c0_i32_0 : i32, i32
  }
  func.func @transform_4(%arg0: i32, %arg1: i32) -> (i32, i32) {
    %c0_i32 = arith.constant 0 : i32
    %c0_i32_0 = arith.constant 0 : i32
    %c0_i32_1 = arith.constant 0 : i32
    return %c0_i32, %c0_i32_0 : i32, i32
  }
  func.func @transform_5(%arg0: i32, %arg1: i32) -> (i32, i32) {
    %c0_i32 = arith.constant 0 : i32
    %c0_i32_0 = arith.constant 0 : i32
    %c0_i32_1 = arith.constant 0 : i32
    return %c0_i32, %c0_i32_0 : i32, i32
  }
  func.func @transform_6(%arg0: i32, %arg1: i32) -> (i32, i32) {
    %c0_i32 = arith.constant 0 : i32
    %c0_i32_0 = arith.constant 0 : i32
    %c0_i32_1 = arith.constant 0 : i32
    return %c0_i32, %c0_i32_0 : i32, i32
  }
  func.func @transform_7(%arg0: i32, %arg1: i32) -> (i32, i32, i32) {
    %c0_i32 = arith.constant 0 : i32
    %c0_i32_0 = arith.constant 0 : i32
    return %arg0, %c0_i32, %arg1 : i32, i32, i32
  }
}

</mosaic_0001>

<llo_original>
// kernel: tpu_custom_call.1
$region0: #{tpu_custom_call.1}
  #allocation0 [shape = 'u32[]', space=smem, size = 0x4, offset = 0x4, fixed_abs, tag = 'smem constant byte address 0x4 - core index']
  #allocation1 [shape = 'u32[72,128]{1,0:T(1,128)}', space=vmem, size = 0x9000, scoped, tag = 'internal scratch']
  #allocation2 [shape = 'bf16[4,132]{1,0:T(4,128)(2,1)}', space=vmem, size = 0x800, scoped, tag = 'scratch operand']
  #allocation3 [shape = 'bf16[8,132]{1,0:T(8,128)(2,1)}', space=vmem, size = 0x1000, scoped, tag = 'scratch operand']
  #allocation4 [shape = 'bf16[12,128]{1,0:T(8,128)(2,1)}', space=vmem, size = 0x1000, scoped, tag = 'scratch operand']
  #allocation5 [shape = 'bf16[24,128]{1,0:T(8,128)(2,1)}', space=vmem, size = 0x1800, scoped, tag = 'scratch operand']
  %s0 = inlined_call_operand.vmem [shape: f32[2,4,128], index: 0, kind: input, shape index: {}]
  %s1 = inlined_call_operand.vmem [shape: bf16[8,12], index: 1, kind: input, shape index: {}]
  %s2 = inlined_call_operand.vmem [shape: f32[8,1], index: 2, kind: input, shape index: {}]
  %s3 = inlined_call_operand.vmem [shape: bf16[8,24], index: 3, kind: input, shape index: {}]
  %s4 = inlined_call_operand.vmem [shape: f32[8,1], index: 4, kind: input, shape index: {}]
  %s5 = inlined_call_operand.vmem [shape: bf16[8,4], index: 5, kind: input, shape index: {}]
  %s6 = inlined_call_operand.vmem [shape: f32[8,1], index: 6, kind: input, shape index: {}]
  %s7 = inlined_call_operand.hbm [shape: f32[2,8,128], index: 7, kind: output, shape index: {}]
  %s8 = sld [smem:[#allocation0]]
  $region69: #{tpu_custom_call.1} parent=0
    _
  %s10 = ssub.s32 1, %s8
  %s11 = scalar_select 0, %s10, %s8
  $region1: #{tpu_custom_call.1} parent=0
    #allocation6 [shape = 'u8[8192]{0}', space=vmem, size = 0x2000, scoped, tag = 'output window, operand 0']
    #allocation7 [shape = 's32[2]{0}', space=sflag, size = 0x8, scoped, tag = 'scoped memory for tpu_custom_call.1']
    %12 = vsyncpa [#allocation7], 0
    %s13 = scalar_lea.sflag [#allocation7], 1
    %14 = vsyncpa %s13, 0
    loop: start=0, step=1, limit=4
    $region2: #{tpu_custom_call.1} parent=1 // loop_pre_header
      _
    $region3: #{tpu_custom_call.1} parent=1 // loop_header
      %s16 = sphi 0, %s20
      %p17 = scmp.ge.s32.totalorder %s16, 4
      %s23 = sphi 0, %s35
      %s24 = sphi 0, %s31
      %s25 = sphi 0, %s23
      %s26 = sphi 0, %s24
      %s27 = sphi 0, %s25
      %s28 = sphi 0, %s26
      %s40 = sphi 0, %s42
      %s43 = sphi 0, %s40
      %s44 = sphi 0, %s43
      %s60 = sphi 0, %s44
      %s64 = sphi 0, %s64
      %s66 = sphi 0, %s64
      %s67 = sphi 0, %s66
      %s81 = sphi 0, %s67
      %s85 = sphi 0, %s85
      %s87 = sphi 0, %s85
      %s88 = sphi 0, %s87
      %s102 = sphi 0, %s88
      %s106 = sphi 0, %s106
      %s108 = sphi 0, %s106
      %s109 = sphi 0, %s108
      %s123 = sphi 0, %s109
      %s127 = sphi 0, %s127
      %s129 = sphi 0, %s127
      %s130 = sphi 0, %s129
      %s144 = sphi 0, %s130
      %s148 = sphi 0, %s148
      %s150 = sphi 0, %s148
      %s151 = sphi 0, %s150
      %s165 = sphi 0, %s151
      %s169 = sphi 0, %s169
      %s171 = sphi 0, %s169
      %s172 = sphi 0, %s171
      %s186 = sphi 0, %s172
      %s194 = sphi 0, %s196
      %s197 = sphi 0, %s194
      %s198 = sphi 0, %s197
      %s214 = sphi 0, %s198
    $region4: #{tpu_custom_call.1} parent=1 // loop_header_branch
      %19 = sbr.rel (%p17) target = $region8
    $region5: #{tpu_custom_call.1} parent=1 // loop_body
      %s21 = ssub.s32 %s16, 1
      %s22 = ssub.s32 %s16, 2
      %s29 = sadd.s32 1, %s24
      %p30 = scmp.ge.s32.totalorder %s29, 1
      %s31 = scalar_select %p30, 0, %s29
      %s32 = sadd.s32 1, %s23
      %s33 = scalar_select %p30, %s32, %s23
      %p34 = scmp.ge.s32.totalorder %s33, 2
      %s35 = scalar_select %p34, 0, %s33
      %s36 = ssub.s32 %s23, %s35
      %s37 = ssub.s32 %s24, %s31
      %s38 = sor.u32 %s36, %s37
      %p39 = scmp.eq.s32.totalorder %s38, 0
      %s41 = sadd.s32 %s40, 1
      %s42 = scalar_select %p39, %s40, %s41
      %p45 = pneg %p39
      %p46 = scmp.eq.s32.totalorder %s16, 1
      %p47 = por %p45, %p46
      %p48 = scmp.ne.s32.totalorder %s40, %s43
      %p49 = scmp.eq.s32.totalorder %s16, 0
      %p50 = por %p48, %p49
      %p51 = scmp.ne.s32.totalorder %s40, %s43
      %p52 = scmp.eq.s32.totalorder %s21, 1
      %p53 = por %p51, %p52
      %p54 = scmp.ne.s32.totalorder %s43, %s44
      %p55 = scmp.eq.s32.totalorder %s21, 0
      %p56 = por %p54, %p55
      %p57 = scmp.ne.s32.totalorder %s43, %s44
      %p58 = scmp.eq.s32.totalorder %s22, 1
      %p59 = por %p57, %p58
      %p61 = scmp.ne.s32.totalorder %s44, %s60
      %p62 = scmp.eq.s32.totalorder %s22, 0
      %p63 = por %p61, %p62
      %s65 = sadd.s32 %s64, 1
      %p68 = scmp.eq.s32.totalorder %s16, 1
      %p69 = scmp.ne.s32.totalorder %s64, %s66
      %p70 = scmp.eq.s32.totalorder %s16, 0
      %p71 = por %p69, %p70
      %p72 = scmp.ne.s32.totalorder %s64, %s66
      %p73 = scmp.eq.s32.totalorder %s21, 1
      %p74 = por %p72, %p73
      %p75 = scmp.ne.s32.totalorder %s66, %s67
      %p76 = scmp.eq.s32.totalorder %s21, 0
      %p77 = por %p75, %p76
      %p78 = scmp.ne.s32.totalorder %s66, %s67
      %p79 = scmp.eq.s32.totalorder %s22, 1
      %p80 = por %p78, %p79
      %p82 = scmp.ne.s32.totalorder %s67, %s81
      %p83 = scmp.eq.s32.totalorder %s22, 0
      %p84 = por %p82, %p83
      %s86 = sadd.s32 %s85, 1
      %p89 = scmp.eq.s32.totalorder %s16, 1
      %p90 = scmp.ne.s32.totalorder %s85, %s87
      %p91 = scmp.eq.s32.totalorder %s16, 0
      %p92 = por %p90, %p91
      %p93 = scmp.ne.s32.totalorder %s85, %s87
      %p94 = scmp.eq.s32.totalorder %s21, 1
      %p95 = por %p93, %p94
      %p96 = scmp.ne.s32.totalorder %s87, %s88
      %p97 = scmp.eq.s32.totalorder %s21, 0
      %p98 = por %p96, %p97
      %p99 = scmp.ne.s32.totalorder %s87, %s88
      %p100 = scmp.eq.s32.totalorder %s22, 1
      %p101 = por %p99, %p100
      %p103 = scmp.ne.s32.totalorder %s88, %s102
      %p104 = scmp.eq.s32.totalorder %s22, 0
      %p105 = por %p103, %p104
      %s107 = sadd.s32 %s106, 1
      %p110 = scmp.eq.s32.totalorder %s16, 1
      %p111 = scmp.ne.s32.totalorder %s106, %s108
      %p112 = scmp.eq.s32.totalorder %s16, 0
      %p113 = por %p111, %p112
      %p114 = scmp.ne.s32.totalorder %s106, %s108
      %p115 = scmp.eq.s32.totalorder %s21, 1
      %p116 = por %p114, %p115
      %p117 = scmp.ne.s32.totalorder %s108, %s109
      %p118 = scmp.eq.s32.totalorder %s21, 0
      %p119 = por %p117, %p118
      %p120 = scmp.ne.s32.totalorder %s108, %s109
      %p121 = scmp.eq.s32.totalorder %s22, 1
      %p122 = por %p120, %p121
      %p124 = scmp.ne.s32.totalorder %s109, %s123
      %p125 = scmp.eq.s32.totalorder %s22, 0
      %p126 = por %p124, %p125
      %s128 = sadd.s32 %s127, 1
      %p131 = scmp.eq.s32.totalorder %s16, 1
      %p132 = scmp.ne.s32.totalorder %s127, %s129
      %p133 = scmp.eq.s32.totalorder %s16, 0
      %p134 = por %p132, %p133
      %p135 = scmp.ne.s32.totalorder %s127, %s129
      %p136 = scmp.eq.s32.totalorder %s21, 1
      %p137 = por %p135, %p136
      %p138 = scmp.ne.s32.totalorder %s129, %s130
      %p139 = scmp.eq.s32.totalorder %s21, 0
      %p140 = por %p138, %p139
      %p141 = scmp.ne.s32.totalorder %s129, %s130
      %p142 = scmp.eq.s32.totalorder %s22, 1
      %p143 = por %p141, %p142
      %p145 = scmp.ne.s32.totalorder %s130, %s144
      %p146 = scmp.eq.s32.totalorder %s22, 0
      %p147 = por %p145, %p146
      %s149 = sadd.s32 %s148, 1
      %p152 = scmp.eq.s32.totalorder %s16, 1
      %p153 = scmp.ne.s32.totalorder %s148, %s150
      %p154 = scmp.eq.s32.totalorder %s16, 0
      %p155 = por %p153, %p154
      %p156 = scmp.ne.s32.totalorder %s148, %s150
      %p157 = scmp.eq.s32.totalorder %s21, 1
      %p158 = por %p156, %p157
      %p159 = scmp.ne.s32.totalorder %s150, %s151
      %p160 = scmp.eq.s32.totalorder %s21, 0
      %p161 = por %p159, %p160
      %p162 = scmp.ne.s32.totalorder %s150, %s151
      %p163 = scmp.eq.s32.totalorder %s22, 1
      %p164 = por %p162, %p163
      %p166 = scmp.ne.s32.totalorder %s151, %s165
      %p167 = scmp.eq.s32.totalorder %s22, 0
      %p168 = por %p166, %p167
      %s170 = sadd.s32 %s169, 1
      %p173 = scmp.eq.s32.totalorder %s16, 1
      %p174 = scmp.ne.s32.totalorder %s169, %s171
      %p175 = scmp.eq.s32.totalorder %s16, 0
      %p176 = por %p174, %p175
      %p177 = scmp.ne.s32.totalorder %s169, %s171
      %p178 = scmp.eq.s32.totalorder %s21, 1
      %p179 = por %p177, %p178
      %p180 = scmp.ne.s32.totalorder %s171, %s172
      %p181 = scmp.eq.s32.totalorder %s21, 0
      %p182 = por %p180, %p181
      %p183 = scmp.ne.s32.totalorder %s171, %s172
      %p184 = scmp.eq.s32.totalorder %s22, 1
      %p185 = por %p183, %p184
      %p187 = scmp.ne.s32.totalorder %s172, %s186
      %p188 = scmp.eq.s32.totalorder %s22, 0
      %p189 = por %p187, %p188
      %s190 = ssub.s32 %s23, %s35
      %s191 = ssub.s32 %s24, %s31
      %s192 = sor.u32 %s190, %s191
      %p193 = scmp.eq.s32.totalorder %s192, 0
      %s195 = sadd.s32 %s194, 1
      %s196 = scalar_select %p193, %s194, %s195
      %p199 = pneg %p193
      %p200 = scmp.eq.s32.totalorder %s16, 1
      %p201 = por %p199, %p200
      %p202 = scmp.ne.s32.totalorder %s194, %s197
      %p203 = scmp.eq.s32.totalorder %s16, 0
      %p204 = por %p202, %p203
      %p205 = scmp.ne.s32.totalorder %s194, %s197
      %p206 = scmp.eq.s32.totalorder %s21, 1
      %p207 = por %p205, %p206
      %p208 = scmp.ne.s32.totalorder %s197, %s198
      %p209 = scmp.eq.s32.totalorder %s21, 0
      %p210 = por %p208, %p209
      %p211 = scmp.ne.s32.totalorder %s197, %s198
      %p212 = scmp.eq.s32.totalorder %s22, 1
      %p213 = por %p211, %p212
      %p215 = scmp.ne.s32.totalorder %s198, %s214
      %p216 = scmp.eq.s32.totalorder %s22, 0
      %p217 = por %p215, %p216
      %p218 = scmp.le.s32.totalorder 1, %s16
      %p219 = scmp.lt.s32.totalorder %s16, 3
      %p220 = pnand %p218, %p219
      %p221 = pneg %p220
      // Predicated region
      $region9: #{tpu_custom_call.1} parent=5 // pred_check
        _
      $region10: #{tpu_custom_call.1} parent=5 // pred_check_branch
        %223 = sbr.rel (%p220) target = $region12
      $region11: #{tpu_custom_call.1} parent=5 // pred_region
        %s224 = ssub.s32 %s16, 1
        // Predicated region
        $region13: #{tpu_custom_call.1} parent=11 // pred_check
          %p225 = pneg %p77
        $region14: #{tpu_custom_call.1} parent=11 // pred_check_branch
          %227 = sbr.rel (%p225) target = $region16
        $region15: #{tpu_custom_call.1} parent=11 // pred_region
          _
        $region16: #{tpu_custom_call.1} parent=11 // pred_fallthru
          _
        // Predicated region
        $region17: #{tpu_custom_call.1} parent=11 // pred_check
          %p228 = pneg %p98
        $region18: #{tpu_custom_call.1} parent=11 // pred_check_branch
          %230 = sbr.rel (%p228) target = $region20
        $region19: #{tpu_custom_call.1} parent=11 // pred_region
          _
        $region20: #{tpu_custom_call.1} parent=11 // pred_fallthru
          _
        // Predicated region
        $region21: #{tpu_custom_call.1} parent=11 // pred_check
          %p231 = pneg %p119
        $region22: #{tpu_custom_call.1} parent=11 // pred_check_branch
          %233 = sbr.rel (%p231) target = $region24
        $region23: #{tpu_custom_call.1} parent=11 // pred_region
          _
        $region24: #{tpu_custom_call.1} parent=11 // pred_fallthru
          _
        // Predicated region
        $region25: #{tpu_custom_call.1} parent=11 // pred_check
          %p234 = pneg %p140
        $region26: #{tpu_custom_call.1} parent=11 // pred_check_branch
          %236 = sbr.rel (%p234) target = $region28
        $region27: #{tpu_custom_call.1} parent=11 // pred_region
          _
        $region28: #{tpu_custom_call.1} parent=11 // pred_fallthru
          _
        // Predicated region
        $region29: #{tpu_custom_call.1} parent=11 // pred_check
          %p237 = pneg %p161
        $region30: #{tpu_custom_call.1} parent=11 // pred_check_branch
          %239 = sbr.rel (%p237) target = $region32
        $region31: #{tpu_custom_call.1} parent=11 // pred_region
          _
        $region32: #{tpu_custom_call.1} parent=11 // pred_fallthru
          _
        // Predicated region
        $region33: #{tpu_custom_call.1} parent=11 // pred_check
          %p240 = pneg %p182
        $region34: #{tpu_custom_call.1} parent=11 // pred_check_branch
          %242 = sbr.rel (%p240) target = $region36
        $region35: #{tpu_custom_call.1} parent=11 // pred_region
          _
        $region36: #{tpu_custom_call.1} parent=11 // pred_fallthru
          _
      $region12: #{tpu_custom_call.1} parent=5 // pred_fallthru
        _
      %p243 = scmp.lt.s32.totalorder %s16, 2
      // Predicated region
      $region37: #{tpu_custom_call.1} parent=5 // pred_check
        %p244 = pneg %p243
      $region38: #{tpu_custom_call.1} parent=5 // pred_check_branch
        %246 = sbr.rel (%p244) target = $region40
      $region39: #{tpu_custom_call.1} parent=5 // pred_region
        // Predicated region
        $region41: #{tpu_custom_call.1} parent=39 // pred_check
          %p247 = pneg %p50
        $region42: #{tpu_custom_call.1} parent=39 // pred_check_branch
          %249 = sbr.rel (%p247) target = $region44
        $region43: #{tpu_custom_call.1} parent=39 // pred_region
          %p250 = scmp.lt.s32.totalorder %s23, 1
          %s251 = scalar_select %p250, %s23, 1
          %p252 = scmp.lt.s32.totalorder %s24, 0
          %s253 = scalar_select %p252, %s24, 0
          %s254 = sadd.s32 %s253, %s251
          %s255 = smul.addr %s254, 4
          %s256 = scalar_lea.vmem %s0, %s255
        $region44: #{tpu_custom_call.1} parent=39 // pred_fallthru
          _
      $region40: #{tpu_custom_call.1} parent=5 // pred_fallthru
        _
      %p257 = scmp.le.s32.totalorder 1, %s16
      %p258 = scmp.lt.s32.totalorder %s16, 3
      %p259 = pnand %p257, %p258
      %p260 = pneg %p259
      // Predicated region
      $region45: #{tpu_custom_call.1} parent=5 // pred_check
        _
      $region46: #{tpu_custom_call.1} parent=5 // pred_check_branch
        %262 = sbr.rel (%p259) target = $region48
      $region47: #{tpu_custom_call.1} parent=5 // pred_region
        %s263 = ssub.s32 %s16, 1
        %p264 = scmp.lt.s32.totalorder %s25, 1
        %s265 = scalar_select %p264, %s25, 1
        %p266 = scmp.lt.s32.totalorder %s26, 0
        %s267 = scalar_select %p266, %s26, 0
        %s268 = sadd.s32 %s267, %s265
        %s269 = smul.addr %s268, 4
        %s270 = scalar_lea.vmem %s0, %s269
        %p271 = pneg %p56
        %p272 = pneg %p53
        %p273 = pneg %p77
        %p274 = pneg %p74
        %p275 = pneg %p98
        %p276 = pneg %p95
        %p277 = pneg %p119
        %p278 = pneg %p116
        %p279 = pneg %p140
        %p280 = pneg %p137
        %p281 = pneg %p161
        %p282 = pneg %p158
        %p283 = pneg %p182
        %p284 = pneg %p179
        %p285 = pneg %p210
        %p286 = pneg %p207
        %s287 = sand.u32 %s197, 1
        %s288 = scalar_lea.sflag [#allocation7], %s287
        %s289 = sand.u32 %s197, 1
        %s290 = smul.addr %s289, 8
        %s291 = scalar_lea.vmem [#allocation6], %s290
        %p292 = scmp.lt.s32.totalorder %s25, 1
        %s293 = scalar_select %p292, %s25, 1
        %p294 = scmp.lt.s32.totalorder %s26, 0
        %s295 = scalar_select %p294, %s26, 0
        %s296 = sadd.s32 %s295, %s293
        %s297 = smul.addr %s296, 4
        %s298 = scalar_lea.vmem %s0, %s297
        %p300 = scmp.eq.s32.totalorder %s26, 0
        // Predicated region
        $region49: #{tpu_custom_call.1} parent=47 // pred_check
          %p301 = pneg %p300
        $region50: #{tpu_custom_call.1} parent=47 // pred_check_branch
          %303 = sbr.rel (%p301) target = $region52
        $region51: #{tpu_custom_call.1} parent=47 // pred_region
          %vm304 = vcmask 25600
          %305 = vst.msk [vmem:[#allocation2] sm:$0x3] %vm304, 0
          %vm306 = vcmask 27648
          %307 = vst.msk [vmem:[#allocation3] sm:$0xf] %vm306, 0
        $region52: #{tpu_custom_call.1} parent=47 // pred_fallthru
          _
        %p308 = scmp.gt.s32.totalorder %s26, 0
        // Predicated region
        $region53: #{tpu_custom_call.1} parent=47 // pred_check
          %p309 = pneg %p308
        $region54: #{tpu_custom_call.1} parent=47 // pred_check_branch
          %311 = sbr.rel (%p309) target = $region56
        $region55: #{tpu_custom_call.1} parent=47 // pred_region
          %v312 = vld [vmem:[#allocation2 + $0x2] sm:$0x3]
          %vm313 = vcmask 25600
          %314 = vst.msk [vmem:[#allocation2] sm:$0x3] %vm313, %v312
          %v315 = vld [vmem:[#allocation3 + $0x4] sm:$0xf]
          %vm316 = vcmask 27648
          %317 = vst.msk [vmem:[#allocation3] sm:$0xf] %vm316, %v315
        $region56: #{tpu_custom_call.1} parent=47 // pred_fallthru
          _
        %v318 = vld [vmem:[%s298] sm:$0xf]
        %v319 = vpack.c.bf16 %v318, %v318
        %v321 = vrot.slane %v319, 2
        %vm322 = vcmask 1041408
        %v325 = vsel %vm322, %v319, %v321
        %327 = vrot.lane.b32.xlu0 %v325, 4
        %v328 = vpop.permute.xlu0 %327
        %v329 = vrot.slane %v328, 6
        %vm330 = vcmask 31744
        %v331 = vsel %vm330, %v329, %v328
        %vm333 = vcmask 1041440
        %vm334 = vcmask 27650
        %vm335 = vmor %vm334, %vm333
        %336 = vst.msk [vmem:[#allocation2] sm:$0xf] %vm335, %v331
        %v337 = vld [vmem:[#allocation2] sm:$0x3]
        %338 = vst [vmem:[#allocation4] sm:$0x3] %v337
        %v339 = vld [vmem:[#allocation2] sm:$0xf]
        %s341 = scalar_lea.vmem [#allocation1], 1
        %342 = vst [vmem:[%s341] ss:$2 sm:$0xff] %v339
        %v343 = vld.sshfl [vmem:[#allocation1] sm:$0xff pattern:$0x75643120]
        %345 = vrot.lane.b32.xlu0 %v343, 126
        %v346 = vpop.permute.xlu0 %345
        %v347 = vrot.slane %v346, 4
        %vm348 = vcmask 1031168
        %v349 = vsel %vm348, %v346, %v347
        %351 = vst [vmem:[#allocation4] sm:$0xc] %v349
        %v352 = vld [vmem:[#allocation2] sm:$0xf]
        %354 = vst [vmem:[#allocation1] ss:$2 sm:$0xff] %v352
        %v355 = vld.sshfl [vmem:[#allocation1] sm:$0xff pattern:$0x75643120]
        %357 = vrot.lane.b32.xlu0 %v355, 124
        %v358 = vpop.permute.xlu0 %357
        %v359 = vrot.slane %v358, 4
        %vm360 = vcmask 1014784
        %v361 = vsel %vm360, %v358, %v359
        %363 = vst [vmem:[#allocation4 + $0x4] sm:$0x3] %v361
        %v364 = vld [vmem:[%s1] sm:$0xf]
        %v365 = vld [vmem:[#allocation4] sm:$0xf]
        %v366 = vld [vmem:[#allocation4 + $0x4] sm:$0x3]
        %v367 = vld [vmem:[%s2] sm:$0xff]
        %369 = vset.pattern.permute.xlu0 0
        %370 = vperm.xlu0 %369, %v367
        %v371 = vpop.permute.xlu0 %370
        %v375 = vunpack.c.l.b16 %v365
        %v376 = vunpack.c.l.b16 %v366
        %v377 = vpack.c.b16 %v376, %v375
        %vm378 = vcmask 97280
        %v380 = vsel %vm378, %v364, 0
        %vm382 = vcmask 1045504
        %v384 = vsel %vm382, %v377, 0
        %386 = vmatpush.bf16.msra.mxu0 0
        %387 = vmatpush.bf16.msra.mxu0 0
        %388 = vmatpush.bf16.msra.mxu0 0
        %389 = vmatpush.bf16.msra.mxu0 0
        %390 = vmatpush.bf16.msra.mxu0 0
        %391 = vmatpush.bf16.msra.mxu0 0
        %392 = vmatpush.bf16.msra.mxu0 0
        %393 = vmatpush.bf16.msra.mxu0 %v384
        %394 = vmatmul.bf16.gmra.mxu0 %v380
        %v395 = vpop.f32.mrf.mxu0
        %v396 = vadd.f32 %v371, %v395
        %v397 = vpop.f32.mrf.mxu0
        %398 = vdwg.mxu0
        %v399 = vmax.f32 %v396, 0.0
        %v400 = vpack.c.bf16 %v399, %v399
        %402 = vrot.lane.b32.xlu0 %v400, 4
        %v403 = vpop.permute.xlu0 %402
        %v404 = vrot.slane %v403, 4
        %v405 = vsel %vm330, %v404, %v403
        %vm407 = vcmask 1043488
        %vm408 = vcmask 31748
        %vm409 = vmor %vm408, %vm407
        %410 = vst.msk [vmem:[#allocation3] sm:$0xff] %vm409, %v405
        %v411 = vld [vmem:[#allocation3] sm:$0xf]
        %412 = vst [vmem:[#allocation5] sm:$0xf] %v411
        %v413 = vld [vmem:[#allocation3] sm:$0xff]
        %415 = vrot.lane.b32.xlu0 %v413, 126
        %v416 = vpop.permute.xlu0 %415
        %v417 = vrot.slane %v416, 4
        %v418 = vsel %vm348, %v416, %v417
        %420 = vst [vmem:[#allocation5 + $0x4] sm:$0xf] %v418
        %v421 = vld [vmem:[#allocation3] sm:$0xff]
        %423 = vrot.lane.b32.xlu0 %v421, 124
        %v424 = vpop.permute.xlu0 %423
        %v425 = vrot.slane %v424, 4
        %v426 = vsel %vm360, %v424, %v425
        %428 = vst [vmem:[#allocation5 + $0x8] sm:$0xf] %v426
        %v429 = vld [vmem:[%s3] sm:$0xf]
        %v430 = vld [vmem:[#allocation5] sm:$0xf]
        %v431 = vld [vmem:[#allocation5 + $0x4] sm:$0xf]
        %v432 = vld [vmem:[#allocation5 + $0x8] sm:$0xf]
        %v433 = vld [vmem:[%s4] sm:$0xff]
        %435 = vset.pattern.permute.xlu0 0
        %436 = vperm.xlu0 %435, %v433
        %v437 = vpop.permute.xlu0 %436
        %v442 = vunpack.c.l.b16 %v430
        %v443 = vunpack.c.l.b16 %v431
        %v444 = vunpack.c.l.b16 %v432
        %v445 = vpack.c.b16 %v443, %v442
        %v446 = vpack.c.b16 %v444, %v444
        %vm448 = vcmask 195584
        %v450 = vsel %vm448, %v429, 0
        %vm452 = vcmask 1043456
        %v454 = vsel %vm452, %v446, 0
        %456 = vmatpush.bf16.msra.mxu0 0
        %457 = vmatpush.bf16.msra.mxu0 0
        %458 = vmatpush.bf16.msra.mxu0 0
        %459 = vmatpush.bf16.msra.mxu0 0
        %460 = vmatpush.bf16.msra.mxu0 0
        %461 = vmatpush.bf16.msra.mxu0 0
        %462 = vmatpush.bf16.msra.mxu0 %v454
        %463 = vmatpush.bf16.msra.mxu0 %v445
        %464 = vmatmul.bf16.gmra.mxu0 %v450
        %v465 = vpop.f32.mrf.mxu0
        %v466 = vadd.f32 %v437, %v465
        %v467 = vpop.f32.mrf.mxu0
        %468 = vdwg.mxu0
        %v469 = vmax.f32 %v466, 0.0
        %v470 = vld [vmem:[%s5] sm:$0xf]
        %v471 = vld [vmem:[#allocation2] sm:$0xf]
        %v472 = vld [vmem:[%s6] sm:$0xff]
        %474 = vset.pattern.permute.xlu0 0
        %475 = vperm.xlu0 %474, %v472
        %v476 = vpop.permute.xlu0 %475
        %479 = vst [vmem:[#allocation1] ss:$4 sm:$0xff] %v471
        %v480 = vld.sshfl [vmem:[#allocation1] sm:$0xff pattern:$0x73625140]
        %v482 = vld.sshfl [vmem:[#allocation1 + $0x8] sm:$0xff pattern:$0x73625140]
        %484 = vrot.lane.b32.xlu0 %v480, 124
        %v485 = vpop.permute.xlu0 %484
        %486 = vrot.lane.b32.xlu0 %v482, 124
        %v487 = vpop.permute.xlu0 %486
        %v488 = vsel %vm360, %v485, %v487
        %vm489 = vcmask 31744
        %v491 = vsel %vm489, %v470, 0
        %v494 = vsel %vm322, %v488, 0
        %496 = vmatpush.bf16.msra.mxu0 0
        %497 = vmatpush.bf16.msra.mxu0 0
        %498 = vmatpush.bf16.msra.mxu0 0
        %499 = vmatpush.bf16.msra.mxu0 0
        %500 = vmatpush.bf16.msra.mxu0 0
        %501 = vmatpush.bf16.msra.mxu0 0
        %502 = vmatpush.bf16.msra.mxu0 0
        %503 = vmatpush.bf16.msra.mxu0 %v494
        %504 = vmatmul.bf16.gmra.mxu0 %v491
        %v505 = vpop.f32.mrf.mxu0
        %v506 = vadd.f32 %v476, %v505
        %v507 = vpop.f32.mrf.mxu0
        %508 = vdwg.mxu0
        %v509 = vadd.f32 %v469, %v506
        %v510 = vmax.f32 %v509, 0.0
        %511 = vst [vmem:[%s291] sm:$0xff] %v510
        %s512 = sand.u32 %s197, 1
        %s513 = scalar_lea.sflag [#allocation7], %s512
        %s514 = sand.u32 %s197, 1
        %s515 = smul.addr %s514, 8
        %s516 = scalar_lea.vmem [#allocation6], %s515
        // Predicated region
        $region57: #{tpu_custom_call.1} parent=47 // pred_check
          %p517 = pneg %p207
        $region58: #{tpu_custom_call.1} parent=47 // pred_check_branch
          %519 = sbr.rel (%p517) target = $region60
        $region59: #{tpu_custom_call.1} parent=47 // pred_region
          %521 = vsyncadd %s513, 0
          %s522 = sadd.s32 %s26, %s25
          %s523 = smul.addr %s522, 8
          %s524 = scalar_lea.hbm %s7, %s523
          %s526 = sshll.u32 %s516, 4
          %s527 = int_to_ptr.vmem [resolvable:$true] %s526
          %s528 = sshll.u32 %s524, 4
          %s529 = int_to_ptr.hbm [resolvable:$true] %s528
          %531 = dma.vmem_to_hbm [thread:$0]  %s527, 128, %s529, %s513
        $region60: #{tpu_custom_call.1} parent=47 // pred_fallthru
          _
      $region48: #{tpu_custom_call.1} parent=5 // pred_fallthru
        _
      %p532 = scmp.le.s32.totalorder 2, %s16
      // Predicated region
      $region61: #{tpu_custom_call.1} parent=5 // pred_check
        %p533 = pneg %p532
      $region62: #{tpu_custom_call.1} parent=5 // pred_check_branch
        %535 = sbr.rel (%p533) target = $region64
      $region63: #{tpu_custom_call.1} parent=5 // pred_region
        %s536 = ssub.s32 %s16, 2
        // Predicated region
        $region65: #{tpu_custom_call.1} parent=63 // pred_check
          %p537 = pneg %p213
        $region66: #{tpu_custom_call.1} parent=63 // pred_check_branch
          %539 = sbr.rel (%p537) target = $region68
        $region67: #{tpu_custom_call.1} parent=63 // pred_region
          %s540 = sand.u32 %s198, 1
          %s541 = scalar_lea.sflag [#allocation7], %s540
          %s542 = sand.u32 %s198, 1
          %s543 = smul.addr %s542, 8
          %s544 = scalar_lea.vmem [#allocation6], %s543
          %546 = dma.done %s541, 128
        $region68: #{tpu_custom_call.1} parent=63 // pred_fallthru
          _
      $region64: #{tpu_custom_call.1} parent=5 // pred_fallthru
        _
    $region6: #{tpu_custom_call.1} parent=1 // loop_footer
      %s20 = sadd.s32 1, %s16
    $region7: #{tpu_custom_call.1} parent=1 // loop_footer_branch
      %15 = sbr.rel target = $region3
    $region8: #{tpu_custom_call.1} parent=1 // loop_exit
      _
    %547 = vsyncpa [#allocation7], 1
    %s548 = scalar_lea.sflag [#allocation7], 1
    %549 = vsyncpa %s548, 1

</llo_original>
